<compile_context>
chip_gen: v7x
topology: tpu7x:2x2x1
jax: 0.10.0
libtpu: 0.0.40
codegen_flags: <defaults>
</compile_context>

<pallas_src>
import functools

import numpy as np
import jax
import jax.numpy as jnp
from jax.experimental import pallas as pl
from jax.experimental.pallas import tpu as pltpu

_LANE = 128          # lane width / N,K padding granularity
_SUBM = 16           # M granularity (bf16 sublane packing)
_VMEM_LIMIT = 32 * 1024 * 1024  # explicit scoped-VMEM budget (safe on v5e/v6e/v7x)


def _round_up(x, m):
    return (x + m - 1) // m * m


# ---------------------------------------------------------------------------
# Fused single-pass matmul + bias + optional residual + optional ReLU kernel
#   A:(TM,Kp) bf16   B:(Kp,TN) bf16   bias:(1,TN) f32   residual:(TM,TN) bf16
#   out = act(A @ B + bias [+ residual])  (f32 accumulate, store in out dtype)
# ---------------------------------------------------------------------------
def _mm_kernel(has_res, relu, *refs):
    if has_res:
        a_ref, b_ref, c_ref, r_ref, o_ref = refs
    else:
        a_ref, b_ref, c_ref, o_ref = refs
        r_ref = None

    y = jnp.dot(a_ref[...], b_ref[...], preferred_element_type=jnp.float32)
    y = y + c_ref[...]
    if has_res:
        y = y + r_ref[...].astype(jnp.float32)
    if relu:
        y = jnp.maximum(y, 0.0)
    o_ref[...] = y.astype(o_ref.dtype)


def fused_matmul(a, w_p, bias_p, n_out, residual=None, relu=True,
                 out_dtype=jnp.bfloat16):
    """a:(M,K) activations; w_p:(Kp,Np) bf16 pre-padded weights; bias_p:(1,Np) f32."""
    M, K = a.shape
    Kp, Np = w_p.shape

    TM = min(128, _round_up(M, _SUBM))
    TN = 256 if Np % 256 == 0 else 128
    Mp = _round_up(M, TM)

    a_p = a.astype(jnp.bfloat16)
    if Mp != M or Kp != K:
        a_p = jnp.pad(a_p, ((0, Mp - M), (0, Kp - K)))

    in_specs = [
        pl.BlockSpec((TM, Kp), lambda i, j: (i, 0)),
        pl.BlockSpec((Kp, TN), lambda i, j: (0, j)),
        pl.BlockSpec((1, TN), lambda i, j: (0, j)),
    ]
    args = [a_p, w_p, bias_p]

    has_res = residual is not None
    if has_res:
        r_p = residual.astype(jnp.bfloat16)
        if Mp != M or Np != n_out:
            r_p = jnp.pad(r_p, ((0, Mp - M), (0, Np - n_out)))
        in_specs.append(pl.BlockSpec((TM, TN), lambda i, j: (i, j)))
        args.append(r_p)

    kernel = functools.partial(_mm_kernel, has_res, relu)
    out = pl.pallas_call(
        kernel,
        out_shape=jax.ShapeDtypeStruct((Mp, Np), out_dtype),
        grid_spec=pltpu.PrefetchScalarGridSpec(
            num_scalar_prefetch=0,
            grid=(Mp // TM, Np // TN),
            in_specs=in_specs,
            out_specs=pl.BlockSpec((TM, TN), lambda i, j: (i, j)),
        ),
        compiler_params=pltpu.CompilerParams(
            dimension_semantics=("parallel", "parallel"),
            vmem_limit_bytes=_VMEM_LIMIT),
    )(*args)

    if Mp != M or Np != n_out:
        out = out[:M, :n_out]
    return out


# ---------------------------------------------------------------------------
# Convolution = im2col (XLA glue) + fused Pallas matmul
# ---------------------------------------------------------------------------
# TODO(synk): the 3x3 convs still materialize the 9x im2col tensor in HBM; a
#             fully fused 9-tap accumulation inside the kernel would cut that
#             activation traffic further.
def _im2col(x, kh, kw, stride, pad):
    n, h, w, c = x.shape
    xp = jnp.pad(x, ((0, 0), (pad, pad), (pad, pad), (0, 0)))
    ho = (h + 2 * pad - kh) // stride + 1
    wo = (w + 2 * pad - kw) // stride + 1
    cols = []
    for dy in range(kh):
        for dx in range(kw):
            cols.append(xp[:, dy:dy + stride * ho:stride,
                           dx:dx + stride * wo:stride, :])
    return jnp.concatenate(cols, axis=-1)  # (N, Ho, Wo, kh*kw*Cin) — bf16


def conv_bn_act(x, pc, stride, pad, relu=True, residual=None,
                out_dtype=jnp.bfloat16):
    """x: NHWC (bf16). pc: prepared conv dict (folded BN). Returns NHWC."""
    kh, kw = pc['kh'], pc['kw']
    if kh == 1 and kw == 1 and stride == 1 and pad == 0:
        patches = x
    else:
        patches = _im2col(x, kh, kw, stride, pad)
    n, ho, wo, kdim = patches.shape
    M = n * ho * wo
    res2d = residual.reshape(M, pc['N']) if residual is not None else None
    out = fused_matmul(patches.reshape(M, kdim), pc['w'], pc['b'], pc['N'],
                       residual=res2d, relu=relu, out_dtype=out_dtype)
    return out.reshape(n, ho, wo, pc['N'])


# ---------------------------------------------------------------------------
# MaxPool 3x3 / stride 2 / pad 1 — tiled Pallas reduction (bounded VMEM)
# ---------------------------------------------------------------------------
def _max9_kernel(x_ref, o_ref):
    o_ref[...] = jnp.max(x_ref[...], axis=0)


def maxpool_3x3_s2_p1(x, block_rows=512):
    n, h, w, c = x.shape
    ho = (h + 2 - 3) // 2 + 1
    wo = (w + 2 - 3) // 2 + 1
    xp = jnp.pad(x, ((0, 0), (1, 1), (1, 1), (0, 0)),
                 constant_values=-jnp.inf)
    pats = [xp[:, dy:dy + 2 * ho:2, dx:dx + 2 * wo:2, :]
            for dy in range(3) for dx in range(3)]
    M = n * ho * wo
    TMP = min(block_rows, _round_up(M, 8))
    Mp = _round_up(M, TMP)
    stacked = jnp.stack(pats, axis=0).reshape(9, M, c)
    if Mp != M:
        stacked = jnp.pad(stacked, ((0, 0), (0, Mp - M), (0, 0)))

    out = pl.pallas_call(
        _max9_kernel,
        out_shape=jax.ShapeDtypeStruct((Mp, c), x.dtype),
        grid_spec=pltpu.PrefetchScalarGridSpec(
            num_scalar_prefetch=0,
            grid=(Mp // TMP,),
            in_specs=[pl.BlockSpec((9, TMP, c), lambda m: (0, m, 0))],
            out_specs=pl.BlockSpec((TMP, c), lambda m: (m, 0)),
        ),
        compiler_params=pltpu.CompilerParams(
            dimension_semantics=("parallel",),
            vmem_limit_bytes=_VMEM_LIMIT),
    )(stacked)
    return out[:M].reshape(n, ho, wo, c)


# ---------------------------------------------------------------------------
# Bilinear upsampling (align_corners=True) — small glue, separable matmuls
# ---------------------------------------------------------------------------
# TODO(synk): bilinear upsample kept as small JAX glue (separable einsums).
def _interp_matrix(in_size, out_size):
    if in_size == 1:
        return np.ones((out_size, 1), np.float32)
    if out_size == 1:
        m = np.zeros((1, in_size), np.float32)
        m[0, 0] = 1.0
        return m
    scale = (in_size - 1) / (out_size - 1)
    src = np.arange(out_size) * scale
    i0 = np.clip(np.floor(src).astype(np.int64), 0, in_size - 1)
    i1 = np.minimum(i0 + 1, in_size - 1)
    w1 = (src - i0).astype(np.float32)
    w0 = 1.0 - w1
    A = np.zeros((out_size, in_size), np.float32)
    np.add.at(A, (np.arange(out_size), i0), w0)
    np.add.at(A, (np.arange(out_size), i1), w1)
    return A


def bilinear_align_corners(x, out_h, out_w):
    n, h, w, c = x.shape
    Ah = jnp.asarray(_interp_matrix(h, out_h))
    Aw = jnp.asarray(_interp_matrix(w, out_w))
    y = jnp.einsum('oh,nhwc->nowc', Ah, x)
    y = jnp.einsum('pw,nowc->nopc', Aw, y)
    return y


# ---------------------------------------------------------------------------
# Parameter initialization (deterministic, synthetic) + offline folding / prep
# ---------------------------------------------------------------------------
def _prep_conv_bn(w, scale, bias):
    """Fold BN scale into weights, reshape to 2D, pad to lane multiples, cast bf16."""
    kh, kw, cin, cout = w.shape
    K, N = kh * kw * cin, cout
    Kp, Np = _round_up(K, _LANE), _round_up(N, _LANE)
    w2 = (w * scale).reshape(K, N)                       # scale broadcasts over cout
    w_p = jnp.pad(w2, ((0, Kp - K), (0, Np - N))).astype(jnp.bfloat16)
    b_p = jnp.pad(bias.reshape(1, N).astype(jnp.float32), ((0, 0), (0, Np - N)))
    return {'w': w_p, 'b': b_p, 'K': K, 'N': N, 'kh': kh, 'kw': kw}


def init_params(key, num_classes=2):
    keys = iter(jax.random.split(key, 256))

    def conv(kh, kw, cin, cout):
        std = (2.0 / (kh * kw * cin)) ** 0.5
        return jax.random.normal(next(keys), (kh, kw, cin, cout),
                                 jnp.float32) * std

    def bn(cout):
        k1, k2, k3, k4 = jax.random.split(next(keys), 4)
        gamma = 1.0 + 0.1 * jax.random.normal(k1, (cout,), jnp.float32)
        beta = 0.1 * jax.random.normal(k2, (cout,), jnp.float32)
        mean = 0.1 * jax.random.normal(k3, (cout,), jnp.float32)
        var = 1.0 + 0.1 * jnp.abs(jax.random.normal(k4, (cout,), jnp.float32))
        scale = gamma / jnp.sqrt(var + 1e-5)
        bias = beta - mean * scale
        return scale, bias

    def conv_bn(kh, kw, cin, cout):
        w = conv(kh, kw, cin, cout)
        s, b = bn(cout)
        return _prep_conv_bn(w, s, b)

    params = {'stem': conv_bn(7, 7, 3, 64)}
    layers = []
    inplanes = 64
    for planes, blocks, stride in [(64, 3, 1), (128, 4, 2),
                                   (256, 6, 2), (512, 3, 2)]:
        layer = []
        for b in range(blocks):
            s = stride if b == 0 else 1
            block = {
                'c1': conv_bn(1, 1, inplanes, planes),
                'c2': conv_bn(3, 3, planes, planes),
                'c3': conv_bn(1, 1, planes, planes * 4),
                'stride': s,
            }
            if b == 0 and (s != 1 or inplanes != planes * 4):
                block['down'] = conv_bn(1, 1, inplanes, planes * 4)
            layer.append(block)
            inplanes = planes * 4
        layers.append(layer)
    params['layers'] = layers

    w_last = conv(1, 1, 2048, num_classes)
    b_last = 0.01 * jax.random.normal(next(keys), (num_classes,), jnp.float32)
    params['last'] = _prep_conv_bn(
        w_last, jnp.ones((num_classes,), jnp.float32), b_last)
    return params


# ---------------------------------------------------------------------------
# Forward pass
# ---------------------------------------------------------------------------
def bottleneck(block, x):
    s = block['stride']
    if 'down' in block:
        identity = conv_bn_act(x, block['down'], stride=s, pad=0, relu=False)
    else:
        identity = x
    out = conv_bn_act(x, block['c1'], stride=1, pad=0, relu=True)
    out = conv_bn_act(out, block['c2'], stride=s, pad=1, relu=True)
    # conv3 + bn3 + residual add + relu fused in one Pallas matmul kernel
    out = conv_bn_act(out, block['c3'], stride=1, pad=0, relu=True,
                      residual=identity)
    return out


def resnet50_forward(params, x_nchw):
    n, cin, h, w = x_nchw.shape
    x = jnp.transpose(x_nchw, (0, 2, 3, 1)).astype(jnp.bfloat16)  # -> NHWC bf16
    x = jnp.concatenate([x, x, x], axis=-1)      # cat along channels (dim=1 in NCHW)

    x = conv_bn_act(x, params['stem'], stride=2, pad=3, relu=True)
    low = x
    x = maxpool_3x3_s2_p1(x)

    high = None
    for li, layer in enumerate(params['layers']):
        for block in layer:
            x = bottleneck(block, x)
        if li == 1:
            high = x

    # last_conv: 1x1 conv with bias (no BN, no activation) -> f32 output
    nn_, hh, ww, cc = x.shape
    lc = params['last']
    out2d = fused_matmul(x.reshape(nn_ * hh * ww, cc), lc['w'], lc['b'],
                         lc['N'], relu=False, out_dtype=jnp.float32)
    x = out2d.reshape(nn_, hh, ww, lc['N'])

    x = bilinear_align_corners(x, h, w)

    out = jnp.transpose(x, (0, 3, 1, 2)).astype(jnp.float32)
    low = jnp.transpose(low, (0, 3, 1, 2)).astype(jnp.float32)
    high = jnp.transpose(high, (0, 3, 1, 2)).astype(jnp.float32)
    return out, low, high


if __name__ == "__main__":
    key = jax.random.PRNGKey(0)
    kp, kx = jax.random.split(key)
    params = init_params(kp, num_classes=2)

    # module does cat([x, x, x], dim=1) into a 3-channel conv -> input has 1 channel
    x = jax.random.normal(kx, (2, 1, 32, 32), jnp.float32)

    out, low, high = resnet50_forward(params, x)
    jax.block_until_ready((out, low, high))

    assert out.shape == (2, 2, 32, 32), out.shape
    assert low.shape == (2, 64, 16, 16), low.shape
    assert high.shape == (2, 512, 4, 4), high.shape
    assert (jnp.all(jnp.isfinite(out)) and jnp.all(jnp.isfinite(low))
            and jnp.all(jnp.isfinite(high)))
    print("KERNEL_OK")
</pallas_src>

<mosaic_0001>
module attributes {stable_mosaic.version = 11 : i64} {
  func.func @_mm_kernel(%arg0: i32, %arg1: i32, %arg2: memref<128x256xbf16, #tpu.memory_space<vmem>>, %arg3: memref<256x128xbf16, #tpu.memory_space<vmem>>, %arg4: memref<1x128xf32, #tpu.memory_space<vmem>>, %arg5: memref<128x128xbf16, #tpu.memory_space<vmem>>) attributes {dimension_semantics = [#tpu.dimension_semantics<parallel>, #tpu.dimension_semantics<parallel>], iteration_bounds = array<i64: 4, 1>, scalar_prefetch = 0 : i64, scratch_operands = 0 : i64, tpu.core_type = #tpu.core_type<tc>, window_params = [{transform_indices = @transform_0, window_bounds = array<i64: 128, 256>}, {transform_indices = @transform_1, window_bounds = array<i64: 256, 128>}, {transform_indices = @transform_2, window_bounds = array<i64: 1, 128>}, {transform_indices = @transform_3, window_bounds = array<i64: 128, 128>}]} {
    %c0 = arith.constant 0 : index
    %c0_0 = arith.constant 0 : index
    %0 = vector.load %arg2[%c0, %c0_0] : memref<128x256xbf16, #tpu.memory_space<vmem>>, vector<128x256xbf16>
    %c0_1 = arith.constant 0 : index
    %c0_2 = arith.constant 0 : index
    %1 = vector.load %arg3[%c0_1, %c0_2] : memref<256x128xbf16, #tpu.memory_space<vmem>>, vector<256x128xbf16>
    %cst = arith.constant dense<0.000000e+00> : vector<128x128xf32>
    %2 = tpu.matmul %0, %1, %cst {dimension_numbers = #tpu.dot_dimension_numbers<[1], [0], [0], [1], [0, 0, 1, 1], [], []>} : vector<128x256xbf16>, vector<256x128xbf16>, vector<128x128xf32> -> vector<128x128xf32>
    %c0_3 = arith.constant 0 : index
    %c0_4 = arith.constant 0 : index
    %3 = vector.load %arg4[%c0_3, %c0_4] : memref<1x128xf32, #tpu.memory_space<vmem>>, vector<1x128xf32>
    %4 = vector.broadcast %3 : vector<1x128xf32> to vector<128x128xf32>
    %5 = arith.addf %2, %4 : vector<128x128xf32>
    %cst_5 = arith.constant 0.000000e+00 : f32
    %6 = vector.broadcast %cst_5 : f32 to vector<128x128xf32>
    %7 = arith.maximumf %5, %6 : vector<128x128xf32>
    %8 = arith.truncf %7 : vector<128x128xf32> to vector<128x128xbf16>
    %c0_6 = arith.constant 0 : index
    %c0_7 = arith.constant 0 : index
    %9 = vector.load %arg5[%c0_6, %c0_7] : memref<128x128xbf16, #tpu.memory_space<vmem>>, vector<128x128xbf16>
    tpu.vector_store %arg5[%c0_6, %c0_7], %8 {strides = array<i32>} : memref<128x128xbf16, #tpu.memory_space<vmem>>, vector<128x128xbf16>,
    return
  }
  func.func @transform_0(%arg0: i32, %arg1: i32) -> (i32, i32) {
    %c0_i32 = arith.constant 0 : i32
    %c0_i32_0 = arith.constant 0 : i32
    return %arg0, %c0_i32 : i32, i32
  }
  func.func @transform_1(%arg0: i32, %arg1: i32) -> (i32, i32) {
    %c0_i32 = arith.constant 0 : i32
    %c0_i32_0 = arith.constant 0 : i32
    return %c0_i32, %arg1 : i32, i32
  }
  func.func @transform_2(%arg0: i32, %arg1: i32) -> (i32, i32) {
    %c0_i32 = arith.constant 0 : i32
    %c0_i32_0 = arith.constant 0 : i32
    return %c0_i32, %arg1 : i32, i32
  }
  func.func @transform_3(%arg0: i32, %arg1: i32) -> (i32, i32) {
    %c0_i32 = arith.constant 0 : i32
    return %arg0, %arg1 : i32, i32
  }
}

</mosaic_0001>

<llo_original>
// kernel: tpu_custom_call.1
$region0: #{tpu_custom_call.1}
  #allocation0 [shape = 'u32[]', space=smem, size = 0x4, offset = 0x4, fixed_abs, tag = 'smem constant byte address 0x4 - core index']
  #allocation1 [shape = 'u32[144,128]{1,0:T(1,128)}', space=vmem, size = 0x12000, scoped, tag = 'internal scratch']
  %s0 = inlined_call_operand.hbm [shape: bf16[512,256], index: 0, kind: input, shape index: {}]
  %s1 = inlined_call_operand.hbm [shape: bf16[256,128], index: 1, kind: input, shape index: {}]
  %s2 = inlined_call_operand.vmem [shape: f32[1,128], index: 2, kind: input, shape index: {}]
  %s3 = inlined_call_operand.hbm [shape: bf16[512,128], index: 3, kind: output, shape index: {}]
  %s4 = sld [smem:[#allocation0]]
  $region53: #{tpu_custom_call.1} parent=0
    _
  %s6 = ssub.s32 1, %s4
  %s7 = scalar_select 0, %s6, %s4
  $region1: #{tpu_custom_call.1} parent=0
    #allocation2 [shape = 'u8[131072]{0}', space=vmem, size = 0x20000, scoped, tag = 'input window, operand 0']
    #allocation3 [shape = 's32[2]{0}', space=sflag, size = 0x8, scoped, tag = 'scoped memory for tpu_custom_call.1']
    #allocation4 [shape = 's32[2]{0}', space=sflag, size = 0x8, scoped, tag = 'scoped memory for tpu_custom_call.1']
    #allocation5 [shape = 'u8[65536]{0}', space=vmem, size = 0x10000, scoped, tag = 'input window, operand 1, single buffered']
    #allocation6 [shape = 's32[1]{0}', space=sflag, size = 0x4, scoped, tag = 'scoped memory for tpu_custom_call.1']
    #allocation7 [shape = 'u8[65536]{0}', space=vmem, size = 0x10000, scoped, tag = 'output window, operand 0']
    %8 = vsyncpa [#allocation3], 0
    %s9 = scalar_lea.sflag [#allocation3], 1
    %10 = vsyncpa %s9, 0
    %11 = vsyncpa [#allocation6], 0
    %12 = vsyncpa [#allocation4], 0
    %s13 = scalar_lea.sflag [#allocation4], 1
    %14 = vsyncpa %s13, 0
    loop: start=0, step=1, limit=6
    $region2: #{tpu_custom_call.1} parent=1 // loop_pre_header
      _
    $region3: #{tpu_custom_call.1} parent=1 // loop_header
      %s16 = sphi 0, %s20
      %p17 = scmp.ge.s32.totalorder %s16, 6
      %s23 = sphi 0, %s35
      %s24 = sphi 0, %s31
      %s25 = sphi 0, %s23
      %s26 = sphi 0, %s24
      %s27 = sphi 0, %s25
      %s28 = sphi 0, %s26
      %s38 = sphi 0, %s40
      %s41 = sphi 0, %s38
      %s42 = sphi 0, %s41
      %s58 = sphi 0, %s42
      %s64 = sphi 0, %s66
      %s67 = sphi 0, %s64
      %s68 = sphi 0, %s67
      %s84 = sphi 0, %s68
      %s90 = sphi 0, %s92
      %s93 = sphi 0, %s90
      %s94 = sphi 0, %s93
      %s110 = sphi 0, %s94
      %s118 = sphi 0, %s120
      %s121 = sphi 0, %s118
      %s122 = sphi 0, %s121
      %s138 = sphi 0, %s122
    $region4: #{tpu_custom_call.1} parent=1 // loop_header_branch
      %19 = sbr.rel (%p17) target = $region8
    $region5: #{tpu_custom_call.1} parent=1 // loop_body
      %s21 = ssub.s32 %s16, 1
      %s22 = ssub.s32 %s16, 2
      %s29 = sadd.s32 1, %s24
      %p30 = scmp.ge.s32.totalorder %s29, 1
      %s31 = scalar_select %p30, 0, %s29
      %s32 = sadd.s32 1, %s23
      %s33 = scalar_select %p30, %s32, %s23
      %p34 = scmp.ge.s32.totalorder %s33, 4
      %s35 = scalar_select %p34, 0, %s33
      %s36 = ssub.s32 %s23, %s35
      %p37 = scmp.eq.s32.totalorder %s36, 0
      %s39 = sadd.s32 %s38, 1
      %s40 = scalar_select %p37, %s38, %s39
      %p43 = pneg %p37
      %p44 = scmp.eq.s32.totalorder %s16, 3
      %p45 = por %p43, %p44
      %p46 = scmp.ne.s32.totalorder %s38, %s41
      %p47 = scmp.eq.s32.totalorder %s16, 0
      %p48 = por %p46, %p47
      %p49 = scmp.ne.s32.totalorder %s38, %s41
      %p50 = scmp.eq.s32.totalorder %s21, 3
      %p51 = por %p49, %p50
      %p52 = scmp.ne.s32.totalorder %s41, %s42
      %p53 = scmp.eq.s32.totalorder %s21, 0
      %p54 = por %p52, %p53
      %p55 = scmp.ne.s32.totalorder %s41, %s42
      %p56 = scmp.eq.s32.totalorder %s22, 3
      %p57 = por %p55, %p56
      %p59 = scmp.ne.s32.totalorder %s42, %s58
      %p60 = scmp.eq.s32.totalorder %s22, 0
      %p61 = por %p59, %p60
      %s62 = ssub.s32 %s24, %s31
      %p63 = scmp.eq.s32.totalorder %s62, 0
      %s65 = sadd.s32 %s64, 1
      %s66 = scalar_select %p63, %s64, %s65
      %p69 = pneg %p63
      %p70 = scmp.eq.s32.totalorder %s16, 3
      %p71 = por %p69, %p70
      %p72 = scmp.ne.s32.totalorder %s64, %s67
      %p73 = scmp.eq.s32.totalorder %s16, 0
      %p74 = por %p72, %p73
      %p75 = scmp.ne.s32.totalorder %s64, %s67
      %p76 = scmp.eq.s32.totalorder %s21, 3
      %p77 = por %p75, %p76
      %p78 = scmp.ne.s32.totalorder %s67, %s68
      %p79 = scmp.eq.s32.totalorder %s21, 0
      %p80 = por %p78, %p79
      %p81 = scmp.ne.s32.totalorder %s67, %s68
      %p82 = scmp.eq.s32.totalorder %s22, 3
      %p83 = por %p81, %p82
      %p85 = scmp.ne.s32.totalorder %s68, %s84
      %p86 = scmp.eq.s32.totalorder %s22, 0
      %p87 = por %p85, %p86
      %s88 = ssub.s32 %s24, %s31
      %p89 = scmp.eq.s32.totalorder %s88, 0
      %s91 = sadd.s32 %s90, 1
      %s92 = scalar_select %p89, %s90, %s91
      %p95 = pneg %p89
      %p96 = scmp.eq.s32.totalorder %s16, 3
      %p97 = por %p95, %p96
      %p98 = scmp.ne.s32.totalorder %s90, %s93
      %p99 = scmp.eq.s32.totalorder %s16, 0
      %p100 = por %p98, %p99
      %p101 = scmp.ne.s32.totalorder %s90, %s93
      %p102 = scmp.eq.s32.totalorder %s21, 3
      %p103 = por %p101, %p102
      %p104 = scmp.ne.s32.totalorder %s93, %s94
      %p105 = scmp.eq.s32.totalorder %s21, 0
      %p106 = por %p104, %p105
      %p107 = scmp.ne.s32.totalorder %s93, %s94
      %p108 = scmp.eq.s32.totalorder %s22, 3
      %p109 = por %p107, %p108
      %p111 = scmp.ne.s32.totalorder %s94, %s110
      %p112 = scmp.eq.s32.totalorder %s22, 0
      %p113 = por %p111, %p112
      %s114 = ssub.s32 %s23, %s35
      %s115 = ssub.s32 %s24, %s31
      %s116 = sor.u32 %s114, %s115
      %p117 = scmp.eq.s32.totalorder %s116, 0
      %s119 = sadd.s32 %s118, 1
      %s120 = scalar_select %p117, %s118, %s119
      %p123 = pneg %p117
      %p124 = scmp.eq.s32.totalorder %s16, 3
      %p125 = por %p123, %p124
      %p126 = scmp.ne.s32.totalorder %s118, %s121
      %p127 = scmp.eq.s32.totalorder %s16, 0
      %p128 = por %p126, %p127
      %p129 = scmp.ne.s32.totalorder %s118, %s121
      %p130 = scmp.eq.s32.totalorder %s21, 3
      %p131 = por %p129, %p130
      %p132 = scmp.ne.s32.totalorder %s121, %s122
      %p133 = scmp.eq.s32.totalorder %s21, 0
      %p134 = por %p132, %p133
      %p135 = scmp.ne.s32.totalorder %s121, %s122
      %p136 = scmp.eq.s32.totalorder %s22, 3
      %p137 = por %p135, %p136
      %p139 = scmp.ne.s32.totalorder %s122, %s138
      %p140 = scmp.eq.s32.totalorder %s22, 0
      %p141 = por %p139, %p140
      %p142 = scmp.le.s32.totalorder 1, %s16
      %p143 = scmp.lt.s32.totalorder %s16, 5
      %p144 = pnand %p142, %p143
      %p145 = pneg %p144
      // Predicated region
      $region9: #{tpu_custom_call.1} parent=5 // pred_check
        _
      $region10: #{tpu_custom_call.1} parent=5 // pred_check_branch
        %147 = sbr.rel (%p144) target = $region12
      $region11: #{tpu_custom_call.1} parent=5 // pred_region
        %s148 = ssub.s32 %s16, 1
        // Predicated region
        $region13: #{tpu_custom_call.1} parent=11 // pred_check
          %p149 = pneg %p80
        $region14: #{tpu_custom_call.1} parent=11 // pred_check_branch
          %151 = sbr.rel (%p149) target = $region16
        $region15: #{tpu_custom_call.1} parent=11 // pred_region
          %s153 = ssub.s32 2048, 2048
          %154 = vsyncadd [#allocation6], %s153
          %s155 = smul.addr %s26, 64
          %s156 = scalar_lea.hbm %s1, %s155
          %s157 = sshll.u32 [#allocation5], 4
          %s158 = int_to_ptr.vmem [resolvable:$true] %s157
          %163 = dma.hbm_to_vmem [thread:$0]  %s156, 2048, %s158, [#allocation6], 64, 64, 4
        $region16: #{tpu_custom_call.1} parent=11 // pred_fallthru
          _
        // Predicated region
        $region17: #{tpu_custom_call.1} parent=11 // pred_check
          %p164 = pneg %p106
        $region18: #{tpu_custom_call.1} parent=11 // pred_check_branch
          %166 = sbr.rel (%p164) target = $region20
        $region19: #{tpu_custom_call.1} parent=11 // pred_region
          %p167 = scmp.lt.s32.totalorder %s26, 0
          %s168 = scalar_select %p167, %s26, 0
          %s169 = scalar_lea.vmem %s2, %s168
        $region20: #{tpu_custom_call.1} parent=11 // pred_fallthru
          _
      $region12: #{tpu_custom_call.1} parent=5 // pred_fallthru
        _
      %p170 = scmp.lt.s32.totalorder %s16, 4
      // Predicated region
      $region21: #{tpu_custom_call.1} parent=5 // pred_check
        %p171 = pneg %p170
      $region22: #{tpu_custom_call.1} parent=5 // pred_check_branch
        %173 = sbr.rel (%p171) target = $region24
      $region23: #{tpu_custom_call.1} parent=5 // pred_region
        // Predicated region
        $region25: #{tpu_custom_call.1} parent=23 // pred_check
          %p174 = pneg %p48
        $region26: #{tpu_custom_call.1} parent=23 // pred_check_branch
          %176 = sbr.rel (%p174) target = $region28
        $region27: #{tpu_custom_call.1} parent=23 // pred_region
          %s177 = sand.u32 %s38, 1
          %s178 = scalar_lea.sflag [#allocation3], %s177
          %s179 = sand.u32 %s38, 1
          %s180 = smul.addr %s179, 128
          %s181 = scalar_lea.vmem [#allocation2], %s180
          %s182 = smul.u32 16, %s23
          %s184 = ssub.s32 2048, 2048
          %185 = vsyncadd %s178, %s184
          %s186 = smul.addr %s182, 2
          %s187 = smul.addr %s186, 64
          %s188 = scalar_lea.hbm %s0, %s187
          %s189 = sshll.u32 %s181, 4
          %s190 = int_to_ptr.vmem [resolvable:$true] %s189
          %195 = dma.hbm_to_vmem [thread:$0]  %s188, 2048, %s190, %s178, 128, 128, 8
        $region28: #{tpu_custom_call.1} parent=23 // pred_fallthru
          _
      $region24: #{tpu_custom_call.1} parent=5 // pred_fallthru
        _
      %p196 = scmp.le.s32.totalorder 1, %s16
      %p197 = scmp.lt.s32.totalorder %s16, 5
      %p198 = pnand %p196, %p197
      %p199 = pneg %p198
      // Predicated region
      $region29: #{tpu_custom_call.1} parent=5 // pred_check
        _
      $region30: #{tpu_custom_call.1} parent=5 // pred_check_branch
        %201 = sbr.rel (%p198) target = $region32
      $region31: #{tpu_custom_call.1} parent=5 // pred_region
        %s202 = ssub.s32 %s16, 1
        %s203 = sand.u32 %s41, 1
        %s204 = scalar_lea.sflag [#allocation3], %s203
        %s205 = sand.u32 %s41, 1
        %s206 = smul.addr %s205, 128
        %s207 = scalar_lea.vmem [#allocation2], %s206
        // Predicated region
        $region33: #{tpu_custom_call.1} parent=31 // pred_check
          %p208 = pneg %p54
        $region34: #{tpu_custom_call.1} parent=31 // pred_check_branch
          %210 = sbr.rel (%p208) target = $region36
        $region35: #{tpu_custom_call.1} parent=31 // pred_region
          %211 = dma.done %s204, 2048
        $region36: #{tpu_custom_call.1} parent=31 // pred_fallthru
          _
        // Predicated region
        $region37: #{tpu_custom_call.1} parent=31 // pred_check
          %p212 = pneg %p80
        $region38: #{tpu_custom_call.1} parent=31 // pred_check_branch
          %214 = sbr.rel (%p212) target = $region40
        $region39: #{tpu_custom_call.1} parent=31 // pred_region
          %215 = dma.done [#allocation6], 2048
        $region40: #{tpu_custom_call.1} parent=31 // pred_fallthru
          _
        %s216 = sand.u32 %s41, 1
        %s217 = scalar_lea.sflag [#allocation3], %s216
        %s218 = sand.u32 %s41, 1
        %s219 = smul.addr %s218, 128
        %s220 = scalar_lea.vmem [#allocation2], %s219
        %p221 = pneg %p54
        %p222 = pneg %p51
        %p223 = pneg %p80
        %p224 = pneg %p77
        %p225 = scmp.lt.s32.totalorder %s26, 0
        %s226 = scalar_select %p225, %s26, 0
        %s227 = scalar_lea.vmem %s2, %s226
        %p228 = pneg %p106
        %p229 = pneg %p103
        %p230 = pneg %p134
        %p231 = pneg %p131
        %s232 = sand.u32 %s121, 1
        %s233 = scalar_lea.sflag [#allocation4], %s232
        %s234 = sand.u32 %s121, 1
        %s235 = smul.addr %s234, 64
        %s236 = scalar_lea.vmem [#allocation7], %s235
        %s237 = smul.u32 16, %s25
        %p238 = scmp.lt.s32.totalorder %s26, 0
        %s239 = scalar_select %p238, %s26, 0
        %s240 = scalar_lea.vmem %s2, %s239
        %s241 = smul.u32 16, %s25
        %v243 = vld [vmem:[%s207] sm:$0xff]
        %v244 = vld [vmem:[%s207 + $0x8] sm:$0xff]
        %v245 = vld [vmem:[%s207 + $0x10] sm:$0xff]
        %v246 = vld [vmem:[%s207 + $0x18] sm:$0xff]
        %v247 = vld [vmem:[%s207 + $0x20] sm:$0xff]
        %v248 = vld [vmem:[%s207 + $0x28] sm:$0xff]
        %v249 = vld [vmem:[%s207 + $0x30] sm:$0xff]
        %v250 = vld [vmem:[%s207 + $0x38] sm:$0xff]
        %v251 = vld [vmem:[%s207 + $0x40] sm:$0xff]
        %v252 = vld [vmem:[%s207 + $0x48] sm:$0xff]
        %v253 = vld [vmem:[%s207 + $0x50] sm:$0xff]
        %v254 = vld [vmem:[%s207 + $0x58] sm:$0xff]
        %v255 = vld [vmem:[%s207 + $0x60] sm:$0xff]
        %v256 = vld [vmem:[%s207 + $0x68] sm:$0xff]
        %v257 = vld [vmem:[%s207 + $0x70] sm:$0xff]
        %v258 = vld [vmem:[%s207 + $0x78] sm:$0xff]
        %v259 = vld [vmem:[#allocation5] sm:$0xf]
        %v260 = vld [vmem:[#allocation5 + $0x4] sm:$0xf]
        %v261 = vld [vmem:[#allocation5 + $0x8] sm:$0xf]
        %v262 = vld [vmem:[#allocation5 + $0xc] sm:$0xf]
        %v263 = vld [vmem:[#allocation5 + $0x10] sm:$0xf]
        %v264 = vld [vmem:[#allocation5 + $0x14] sm:$0xf]
        %v265 = vld [vmem:[#allocation5 + $0x18] sm:$0xf]
        %v266 = vld [vmem:[#allocation5 + $0x1c] sm:$0xf]
        %v267 = vld [vmem:[#allocation5 + $0x20] sm:$0xf]
        %v268 = vld [vmem:[#allocation5 + $0x24] sm:$0xf]
        %v269 = vld [vmem:[#allocation5 + $0x28] sm:$0xf]
        %v270 = vld [vmem:[#allocation5 + $0x2c] sm:$0xf]
        %v271 = vld [vmem:[#allocation5 + $0x30] sm:$0xf]
        %v272 = vld [vmem:[#allocation5 + $0x34] sm:$0xf]
        %v273 = vld [vmem:[#allocation5 + $0x38] sm:$0xf]
        %v274 = vld [vmem:[#allocation5 + $0x3c] sm:$0xf]
        %v275 = vld [vmem:[#allocation5 + $0x40] sm:$0xf]
        %v276 = vld [vmem:[#allocation5 + $0x44] sm:$0xf]
        %v277 = vld [vmem:[#allocation5 + $0x48] sm:$0xf]
        %v278 = vld [vmem:[#allocation5 + $0x4c] sm:$0xf]
        %v279 = vld [vmem:[#allocation5 + $0x50] sm:$0xf]
        %v280 = vld [vmem:[#allocation5 + $0x54] sm:$0xf]
        %v281 = vld [vmem:[#allocation5 + $0x58] sm:$0xf]
        %v282 = vld [vmem:[#allocation5 + $0x5c] sm:$0xf]
        %v283 = vld [vmem:[#allocation5 + $0x60] sm:$0xf]
        %v284 = vld [vmem:[#allocation5 + $0x64] sm:$0xf]
        %v285 = vld [vmem:[#allocation5 + $0x68] sm:$0xf]
        %v286 = vld [vmem:[#allocation5 + $0x6c] sm:$0xf]
        %v287 = vld [vmem:[#allocation5 + $0x70] sm:$0xf]
        %v288 = vld [vmem:[#allocation5 + $0x74] sm:$0xf]
        %v289 = vld [vmem:[#allocation5 + $0x78] sm:$0xf]
        %v290 = vld [vmem:[#allocation5 + $0x7c] sm:$0xf]
        %v291 = vld [vmem:[%s240] sm:$0x1]
        %v293 = vlaneseq
        %v294 = vshrl.u32 %v293, 7
        %v295 = vsub.s32 0, %v294
        %v296 = vrot.slane %v291, %v295
        %v314 = vunpack.c.l.b16 %v243
        %v315 = vunpack.c.h.b16 %v243
        %v316 = vunpack.c.l.b16 %v244
        %v317 = vunpack.c.h.b16 %v244
        %v318 = vunpack.c.l.b16 %v245
        %v319 = vunpack.c.h.b16 %v245
        %v320 = vunpack.c.l.b16 %v246
        %v321 = vunpack.c.h.b16 %v246
        %v322 = vunpack.c.l.b16 %v247
        %v323 = vunpack.c.h.b16 %v247
        %v324 = vunpack.c.l.b16 %v248
        %v325 = vunpack.c.h.b16 %v248
        %v326 = vunpack.c.l.b16 %v249
        %v327 = vunpack.c.h.b16 %v249
        %v328 = vunpack.c.l.b16 %v250
        %v329 = vunpack.c.h.b16 %v250
        %v330 = vunpack.c.l.b16 %v251
        %v331 = vunpack.c.h.b16 %v251
        %v332 = vunpack.c.l.b16 %v252
        %v333 = vunpack.c.h.b16 %v252
        %v334 = vunpack.c.l.b16 %v253
        %v335 = vunpack.c.h.b16 %v253
        %v336 = vunpack.c.l.b16 %v254
        %v337 = vunpack.c.h.b16 %v254
        %v338 = vunpack.c.l.b16 %v255
        %v339 = vunpack.c.h.b16 %v255
        %v340 = vunpack.c.l.b16 %v256
        %v341 = vunpack.c.h.b16 %v256
        %v342 = vunpack.c.l.b16 %v257
        %v343 = vunpack.c.h.b16 %v257
        %v344 = vunpack.c.l.b16 %v258
        %v345 = vunpack.c.h.b16 %v258
        %v346 = vpack.c.b16 %v316, %v314
        %v347 = vpack.c.b16 %v317, %v315
        %v348 = vpack.c.b16 %v320, %v318
        %v349 = vpack.c.b16 %v321, %v319
        %v350 = vpack.c.b16 %v324, %v322
        %v351 = vpack.c.b16 %v325, %v323
        %v352 = vpack.c.b16 %v328, %v326
        %v353 = vpack.c.b16 %v329, %v327
        %v354 = vpack.c.b16 %v332, %v330
        %v355 = vpack.c.b16 %v333, %v331
        %v356 = vpack.c.b16 %v336, %v334
        %v357 = vpack.c.b16 %v337, %v335
        %v358 = vpack.c.b16 %v340, %v338
        %v359 = vpack.c.b16 %v341, %v339
        %v360 = vpack.c.b16 %v344, %v342
        %v361 = vpack.c.b16 %v345, %v343
        %v410 = vunpack.c.l.b16 %v259
        %v411 = vunpack.c.l.b16 %v260
        %v412 = vunpack.c.l.b16 %v261
        %v413 = vunpack.c.l.b16 %v262
        %v414 = vunpack.c.l.b16 %v263
        %v415 = vunpack.c.l.b16 %v264
        %v416 = vunpack.c.l.b16 %v265
        %v417 = vunpack.c.l.b16 %v266
        %v418 = vunpack.c.l.b16 %v267
        %v419 = vunpack.c.l.b16 %v268
        %v420 = vunpack.c.l.b16 %v269
        %v421 = vunpack.c.l.b16 %v270
        %v422 = vunpack.c.l.b16 %v271
        %v423 = vunpack.c.l.b16 %v272
        %v424 = vunpack.c.l.b16 %v273
        %v425 = vunpack.c.l.b16 %v274
        %v426 = vunpack.c.l.b16 %v275
        %v427 = vunpack.c.l.b16 %v276
        %v428 = vunpack.c.l.b16 %v277
        %v429 = vunpack.c.l.b16 %v278
        %v430 = vunpack.c.l.b16 %v279
        %v431 = vunpack.c.l.b16 %v280
        %v432 = vunpack.c.l.b16 %v281
        %v433 = vunpack.c.l.b16 %v282
        %v434 = vunpack.c.l.b16 %v283
        %v435 = vunpack.c.l.b16 %v284
        %v436 = vunpack.c.l.b16 %v285
        %v437 = vunpack.c.l.b16 %v286
        %v438 = vunpack.c.l.b16 %v287
        %v439 = vunpack.c.l.b16 %v288
        %v440 = vunpack.c.l.b16 %v289
        %v441 = vunpack.c.l.b16 %v290
        %v442 = vpack.c.b16 %v411, %v410
        %v443 = vpack.c.b16 %v413, %v412
        %v444 = vpack.c.b16 %v415, %v414
        %v445 = vpack.c.b16 %v417, %v416
        %v446 = vpack.c.b16 %v419, %v418
        %v447 = vpack.c.b16 %v421, %v420
        %v448 = vpack.c.b16 %v423, %v422
        %v449 = vpack.c.b16 %v425, %v424
        %v450 = vpack.c.b16 %v427, %v426
        %v451 = vpack.c.b16 %v429, %v428
        %v452 = vpack.c.b16 %v431, %v430
        %v453 = vpack.c.b16 %v433, %v432
        %v454 = vpack.c.b16 %v435, %v434
        %v455 = vpack.c.b16 %v437, %v436
        %v456 = vpack.c.b16 %v439, %v438
        %v457 = vpack.c.b16 %v441, %v440
        %474 = vmatprep.subr.bf16.mxu0 0
        %475 = vmatpush1.bf16.msra.mxu0 %v442
        %476 = vmatprep.subr.bf16.mxu0 0
        %477 = vmatpush1.bf16.msra.mxu0 %v443
        %478 = vmatprep.subr.bf16.mxu0 0
        %479 = vmatpush1.bf16.msra.mxu0 %v444
        %480 = vmatprep.subr.bf16.mxu0 0
        %481 = vmatpush1.bf16.msra.mxu0 %v445
        %482 = vmatprep.subr.bf16.mxu0 0
        %483 = vmatpush1.bf16.msra.mxu0 %v446
        %484 = vmatprep.subr.bf16.mxu0 0
        %485 = vmatpush1.bf16.msra.mxu0 %v447
        %486 = vmatprep.subr.bf16.mxu0 0
        %487 = vmatpush1.bf16.msra.mxu0 %v448
        %488 = vmatprep.subr.bf16.mxu0 0
        %489 = vmatpush1.bf16.msra.mxu0 %v449
        %490 = vmatprep.subr.bf16.mxu0 0
        %491 = vmatpush1.bf16.msra.mxu0 %v450
        %492 = vmatprep.subr.bf16.mxu0 0
        %493 = vmatpush1.bf16.msra.mxu0 %v451
        %494 = vmatprep.subr.bf16.mxu0 0
        %495 = vmatpush1.bf16.msra.mxu0 %v452
        %496 = vmatprep.subr.bf16.mxu0 0
        %497 = vmatpush1.bf16.msra.mxu0 %v453
        %498 = vmatprep.subr.bf16.mxu0 0
        %499 = vmatpush1.bf16.msra.mxu0 %v454
        %500 = vmatprep.subr.bf16.mxu0 0
        %501 = vmatpush1.bf16.msra.mxu0 %v455
        %502 = vmatprep.subr.bf16.mxu0 0
        %503 = vmatpush1.bf16.msra.mxu0 %v456
        %504 = vmatprep.subr.bf16.mxu0 0
        %505 = vmatpush1.bf16.msra.mxu0 %v457
        %506 = vmatprep.mubr.bf16.mxu0 %v347
        %507 = vmatmul.mubr.bf16.gmra.mrb[0].mxu0 %v346
        %v508 = vpop.f32.mrb[0].mxu0
        %v509 = vadd.f32 %v296, %v508
        %v510 = vpop.f32.mrb[0].mxu0
        %v511 = vpop.f32.mrb[0].mxu0
        %v512 = vadd.f32 %v296, %v511
        %v513 = vpop.f32.mrb[0].mxu0
        %514 = vmatprep.mubr.bf16.mxu0 %v349
        %515 = vmatmul.mubr.bf16.gmra.mrb[0].mxu0 %v348
        %v516 = vpop.f32.mrb[0].mxu0
        %v517 = vadd.f32 %v296, %v516
        %v518 = vpop.f32.mrb[0].mxu0
        %v519 = vpop.f32.mrb[0].mxu0
        %v520 = vadd.f32 %v296, %v519
        %v521 = vpop.f32.mrb[0].mxu0
        %522 = vmatprep.mubr.bf16.mxu0 %v351
        %523 = vmatmul.mubr.bf16.gmra.mrb[0].mxu0 %v350
        %v524 = vpop.f32.mrb[0].mxu0
        %v525 = vadd.f32 %v296, %v524
        %v526 = vpop.f32.mrb[0].mxu0
        %v527 = vpop.f32.mrb[0].mxu0
        %v528 = vadd.f32 %v296, %v527
        %v529 = vpop.f32.mrb[0].mxu0
        %530 = vmatprep.mubr.bf16.mxu0 %v353
        %531 = vmatmul.mubr.bf16.gmra.mrb[0].mxu0 %v352
        %v532 = vpop.f32.mrb[0].mxu0
        %v533 = vadd.f32 %v296, %v532
        %v534 = vpop.f32.mrb[0].mxu0
        %v535 = vpop.f32.mrb[0].mxu0
        %v536 = vadd.f32 %v296, %v535
        %v537 = vpop.f32.mrb[0].mxu0
        %538 = vmatprep.mubr.bf16.mxu0 %v355
        %539 = vmatmul.mubr.bf16.gmra.mrb[0].mxu0 %v354
        %v540 = vpop.f32.mrb[0].mxu0
        %v541 = vadd.f32 %v296, %v540
        %v542 = vpop.f32.mrb[0].mxu0
        %v543 = vpop.f32.mrb[0].mxu0
        %v544 = vadd.f32 %v296, %v543
        %v545 = vpop.f32.mrb[0].mxu0
        %546 = vmatprep.mubr.bf16.mxu0 %v357
        %547 = vmatmul.mubr.bf16.gmra.mrb[0].mxu0 %v356
        %v548 = vpop.f32.mrb[0].mxu0
        %v549 = vadd.f32 %v296, %v548
        %v550 = vpop.f32.mrb[0].mxu0
        %v551 = vpop.f32.mrb[0].mxu0
        %v552 = vadd.f32 %v296, %v551
        %v553 = vpop.f32.mrb[0].mxu0
        %554 = vmatprep.mubr.bf16.mxu0 %v359
        %555 = vmatmul.mubr.bf16.gmra.mrb[0].mxu0 %v358
        %v556 = vpop.f32.mrb[0].mxu0
        %v557 = vadd.f32 %v296, %v556
        %v558 = vpop.f32.mrb[0].mxu0
        %v559 = vpop.f32.mrb[0].mxu0
        %v560 = vadd.f32 %v296, %v559
        %v561 = vpop.f32.mrb[0].mxu0
        %562 = vmatprep.mubr.bf16.mxu0 %v361
        %563 = vmatmul.mubr.bf16.gmra.mrb[0].mxu0 %v360
        %v564 = vpop.f32.mrb[0].mxu0
        %v565 = vadd.f32 %v296, %v564
        %v566 = vpop.f32.mrb[0].mxu0
        %v567 = vpop.f32.mrb[0].mxu0
        %v568 = vadd.f32 %v296, %v567
        %v569 = vpop.f32.mrb[0].mxu0
        %570 = vdwg.mxu0
        %v571 = vmax.f32 %v509, 0.0
        %v572 = vmax.f32 %v512, 0.0
        %v573 = vmax.f32 %v517, 0.0
        %v574 = vmax.f32 %v520, 0.0
        %v575 = vmax.f32 %v525, 0.0
        %v576 = vmax.f32 %v528, 0.0
        %v577 = vmax.f32 %v533, 0.0
        %v578 = vmax.f32 %v536, 0.0
        %v579 = vmax.f32 %v541, 0.0
        %v580 = vmax.f32 %v544, 0.0
        %v581 = vmax.f32 %v549, 0.0
        %v582 = vmax.f32 %v552, 0.0
        %v583 = vmax.f32 %v557, 0.0
        %v584 = vmax.f32 %v560, 0.0
        %v585 = vmax.f32 %v565, 0.0
        %v586 = vmax.f32 %v568, 0.0
        %v587 = vpack.c.bf16 %v572, %v571
        %v588 = vpack.c.bf16 %v574, %v573
        %v589 = vpack.c.bf16 %v576, %v575
        %v590 = vpack.c.bf16 %v578, %v577
        %v591 = vpack.c.bf16 %v580, %v579
        %v592 = vpack.c.bf16 %v582, %v581
        %v593 = vpack.c.bf16 %v584, %v583
        %v594 = vpack.c.bf16 %v586, %v585
        %v603 = vunpack.c.l.b16 %v587
        %v604 = vunpack.c.h.b16 %v587
        %v605 = vunpack.c.l.b16 %v588
        %v606 = vunpack.c.h.b16 %v588
        %v607 = vunpack.c.l.b16 %v589
        %v608 = vunpack.c.h.b16 %v589
        %v609 = vunpack.c.l.b16 %v590
        %v610 = vunpack.c.h.b16 %v590
        %v611 = vunpack.c.l.b16 %v591
        %v612 = vunpack.c.h.b16 %v591
        %v613 = vunpack.c.l.b16 %v592
        %v614 = vunpack.c.h.b16 %v592
        %v615 = vunpack.c.l.b16 %v593
        %v616 = vunpack.c.h.b16 %v593
        %v617 = vunpack.c.l.b16 %v594
        %v618 = vunpack.c.h.b16 %v594
        %v619 = vpack.c.b16 %v603, %v603
        %v620 = vpack.c.b16 %v604, %v604
        %v621 = vpack.c.b16 %v605, %v605
        %v622 = vpack.c.b16 %v606, %v606
        %v623 = vpack.c.b16 %v607, %v607
        %v624 = vpack.c.b16 %v608, %v608
        %v625 = vpack.c.b16 %v609, %v609
        %v626 = vpack.c.b16 %v610, %v610
        %v627 = vpack.c.b16 %v611, %v611
        %v628 = vpack.c.b16 %v612, %v612
        %v629 = vpack.c.b16 %v613, %v613
        %v630 = vpack.c.b16 %v614, %v614
        %v631 = vpack.c.b16 %v615, %v615
        %v632 = vpack.c.b16 %v616, %v616
        %v633 = vpack.c.b16 %v617, %v617
        %v634 = vpack.c.b16 %v618, %v618
        %651 = vst [vmem:[%s236] sm:$0xf] %v619
        %652 = vst [vmem:[%s236 + $0x4] sm:$0xf] %v620
        %653 = vst [vmem:[%s236 + $0x8] sm:$0xf] %v621
        %654 = vst [vmem:[%s236 + $0xc] sm:$0xf] %v622
        %655 = vst [vmem:[%s236 + $0x10] sm:$0xf] %v623
        %656 = vst [vmem:[%s236 + $0x14] sm:$0xf] %v624
        %657 = vst [vmem:[%s236 + $0x18] sm:$0xf] %v625
        %658 = vst [vmem:[%s236 + $0x1c] sm:$0xf] %v626
        %659 = vst [vmem:[%s236 + $0x20] sm:$0xf] %v627
        %660 = vst [vmem:[%s236 + $0x24] sm:$0xf] %v628
        %661 = vst [vmem:[%s236 + $0x28] sm:$0xf] %v629
        %662 = vst [vmem:[%s236 + $0x2c] sm:$0xf] %v630
        %663 = vst [vmem:[%s236 + $0x30] sm:$0xf] %v631
        %664 = vst [vmem:[%s236 + $0x34] sm:$0xf] %v632
        %665 = vst [vmem:[%s236 + $0x38] sm:$0xf] %v633
        %666 = vst [vmem:[%s236 + $0x3c] sm:$0xf] %v634
        %s667 = sand.u32 %s121, 1
        %s668 = scalar_lea.sflag [#allocation4], %s667
        %s669 = sand.u32 %s121, 1
        %s670 = smul.addr %s669, 64
        %s671 = scalar_lea.vmem [#allocation7], %s670
        // Predicated region
        $region41: #{tpu_custom_call.1} parent=31 // pred_check
          %p672 = pneg %p131
        $region42: #{tpu_custom_call.1} parent=31 // pred_check_branch
          %674 = sbr.rel (%p672) target = $region44
        $region43: #{tpu_custom_call.1} parent=31 // pred_region
          %s675 = smul.u32 16, %s25
          %s677 = ssub.s32 1024, 1024
          %678 = vsyncadd %s668, %s677
          %s679 = sadd.s32 %s26, %s675
          %s680 = smul.addr %s679, 64
          %s681 = scalar_lea.hbm %s3, %s680
          %s682 = sshll.u32 %s671, 4
          %s683 = int_to_ptr.vmem [resolvable:$true] %s682
          %688 = dma.vmem_to_hbm [thread:$0]  %s683, 1024, %s681, %s668, 64, 64, 4
        $region44: #{tpu_custom_call.1} parent=31 // pred_fallthru
          _
      $region32: #{tpu_custom_call.1} parent=5 // pred_fallthru
        _
      %p689 = scmp.le.s32.totalorder 2, %s16
      // Predicated region
      $region45: #{tpu_custom_call.1} parent=5 // pred_check
        %p690 = pneg %p689
      $region46: #{tpu_custom_call.1} parent=5 // pred_check_branch
        %692 = sbr.rel (%p690) target = $region48
      $region47: #{tpu_custom_call.1} parent=5 // pred_region
        %s693 = ssub.s32 %s16, 2
        // Predicated region
        $region49: #{tpu_custom_call.1} parent=47 // pred_check
          %p694 = pneg %p137
        $region50: #{tpu_custom_call.1} parent=47 // pred_check_branch
          %696 = sbr.rel (%p694) target = $region52
        $region51: #{tpu_custom_call.1} parent=47 // pred_region
          %s697 = sand.u32 %s122, 1
          %s698 = scalar_lea.sflag [#allocation4], %s697
          %s699 = sand.u32 %s122, 1
          %s700 = smul.addr %s699, 64
          %s701 = scalar_lea.vmem [#allocation7], %s700
          %702 = dma.done %s698, 1024
        $region52: #{tpu_custom_call.1} parent=47 // pred_fallthru
          _
      $region48: #{tpu_custom_call.1} parent=5 // pred_fallthru
        _
    $region6: #{tpu_custom_call.1} parent=1 // loop_footer
      %s20 = sadd.s32 1, %s16
    $region7: #{tpu_custom_call.1} parent=1 // loop_footer_branch
      %15 = sbr.rel target = $region3
    $region8: #{tpu_custom_call.1} parent=1 // loop_exit
      _
    %703 = vsyncpa [#allocation3], 1
    %s704 = scalar_lea.sflag [#allocation3], 1
    %705 = vsyncpa %s704, 1
    %706 = vsyncpa [#allocation6], 1
    %707 = vsyncpa [#allocation4], 1
    %s708 = scalar_lea.sflag [#allocation4], 1
    %709 = vsyncpa %s708, 1

</llo_original>
